<compile_context>
chip_gen: v7x
topology: tpu7x:2x2x1
jax: 0.10.0
libtpu: 0.0.40
codegen_flags: <defaults>
</compile_context>

<pallas_src>
import functools
import math

import jax
import jax.numpy as jnp
from jax import lax
from jax.experimental import pallas as pl
from jax.experimental.pallas import tpu as pltpu

EPS = 1e-12  # matches torch.nn.functional.normalize default eps


def _arc_subcenter_kernel(f_ref, w_ref, o_ref, *, k):
    """f_ref: (tile_b, D) features; w_ref: (k, tile_out, D) pre-normalized weights;
    o_ref: (tile_b, tile_out) max-over-sub-center cosines for this tile."""
    _, tile_out, d = w_ref.shape

    # L2-normalize features in f32.  rsqrt -> EUP slot; clamping the squared
    # norm at EPS^2 reproduces F.normalize's  x / max(||x||, eps)  exactly.
    f = f_ref[...].astype(jnp.float32)
    inv_norm = lax.rsqrt(
        jnp.maximum(jnp.sum(f * f, axis=-1, keepdims=True), EPS * EPS))
    fn = (f * inv_norm).astype(w_ref.dtype)  # matmul operand dtype == weight dtype

    # Fused sub-center matmul: merge the k leading slabs (leading-dim merge is
    # layout-preserving since tile_out is a multiple of the 8-sublane tile) so
    # the MXU sees one N = k*tile_out matmul per grid step instead of k narrow
    # ones.  Contraction is on the LAST dim of both operands -> the weight tile
    # is consumed in its native (rows, D) layout, no XLU transpose.
    w = w_ref[...].reshape(k * tile_out, d)
    cos = lax.dot_general(
        fn, w,
        dimension_numbers=(((1,), (1,)), ((), ())),
        preferred_element_type=jnp.float32,
    )  # (tile_b, k*tile_out), f32 accumulation

    # Max over the k sub-centers = max over k lane-aligned column slices.
    best = cos[:, :tile_out]
    for s in range(1, k):
        best = jnp.maximum(best, cos[:, s * tile_out:(s + 1) * tile_out])

    o_ref[...] = best.astype(o_ref.dtype)


def prepare_weights(weight, *, out_features, k, weight_dtype=jnp.bfloat16):
    """One-time parameter preprocessing (cache the result; do NOT run per call).

    weight: [out_features * k, in_features], row i = class i//k, sub-center i%k.
    Returns wn_k: [k, out_features, in_features], L2-normalized rows, `weight_dtype`.
    """
    out_k, d = weight.shape
    assert out_k == out_features * k
    w32 = weight.astype(jnp.float32)
    w_k = jnp.transpose(w32.reshape(out_features, k, d), (1, 0, 2))  # (k, out, D)
    inv = lax.rsqrt(
        jnp.maximum(jnp.sum(w_k * w_k, axis=-1, keepdims=True), EPS * EPS))
    return (w_k * inv).astype(weight_dtype)


def _vmem_capacity_bytes(default_bytes=64 * 1024 * 1024):
    """Physical VMEM per TensorCore; conservative (v7x-sized) default on failure."""
    try:
        return int(pltpu.get_tpu_info().vmem_capacity_bytes)
    except Exception:  # pragma: no cover - robustness only
        return default_bytes


def _step_vmem_bytes(tile_b, tile_out, d, k, w_itemsize, f_itemsize, o_itemsize):
    """VMEM footprint of one grid step (the single accounting used everywhere)."""
    w = 2 * k * tile_out * d * w_itemsize        # double-buffered weight slab
    f = 2 * tile_b * d * f_itemsize              # feature tile (Pallas keeps 2 bufs)
    o = 2 * tile_b * tile_out * o_itemsize       # double-buffered output tile
    acc = 2 * tile_b * k * tile_out * 4          # f32 cos/best intermediates (slack x2)
    return w + f + o + acc


def _pick_tiles(batch, d, out_features, k, w_itemsize, f_itemsize, o_itemsize,
                vmem_limit_bytes):
    """Pick (tile_b, tile_out): largest lane-dense class tile fitting the budget."""
    # Batch tile: full batch when small; otherwise a multiple-of-8 divisor <= 256
    # to bound the f32 (tile_b, k*tile_out) intermediate / vreg pressure.
    if batch <= 256:
        tile_b = batch
    else:
        tile_b = batch
        for cand in range(256, 7, -8):
            if batch % cand == 0:
                tile_b = cand
                break

    if out_features % 128 != 0:
        # Lane constraint: output last dim must be a 128-multiple or the full dim.
        return tile_b, out_features

    tile_out = 128  # floor
    t = out_features
    while t >= 128:
        if out_features % t == 0 and _step_vmem_bytes(
                tile_b, t, d, k, w_itemsize, f_itemsize, o_itemsize) <= vmem_limit_bytes:
            tile_out = t
            break
        t -= 128
    return tile_b, tile_out


def arc_margin_product_subcenter(features, wn_k, *, out_features, k,
                                 tile_b=None, tile_out=None):
    """features: [B, in_features]; wn_k: [k, out_features, in_features] pre-normalized.

    Returns [B, out_features] = max over k sub-centers of cos(features, weight)."""
    B, D = features.shape
    assert wn_k.shape == (k, out_features, D)

    w_isz = jnp.dtype(wn_k.dtype).itemsize
    f_isz = jnp.dtype(features.dtype).itemsize
    o_isz = jnp.dtype(features.dtype).itemsize

    vmem_cap = _vmem_capacity_bytes()
    # ~20% headroom under physical per-TC VMEM: ~102 MiB on v5e/v6e (128 MiB),
    # ~51 MiB per TensorCore on v7x (64 MiB).  Budget is per-TC, which is what
    # matters when the "parallel" axes are megacore-sharded.
    vmem_limit = int(vmem_cap * 0.8)

    auto_tb, auto_to = _pick_tiles(B, D, out_features, k, w_isz, f_isz, o_isz,
                                   vmem_limit)
    tile_b = auto_tb if tile_b is None else tile_b
    tile_out = auto_to if tile_out is None else tile_out
    assert B % tile_b == 0, "batch must be divisible by tile_b"
    assert out_features % tile_out == 0, "out_features must be divisible by tile_out"

    # Unified VMEM check (same formula the picker used).  Handles the forced
    # tile_out == out_features fallback for non-128-multiple class counts.
    needed = _step_vmem_bytes(tile_b, tile_out, D, k, w_isz, f_isz, o_isz)
    if needed > vmem_cap:
        raise ValueError(
            f"tile ({tile_b} x {tile_out}) needs ~{needed >> 20} MiB VMEM but the "
            f"chip has {vmem_cap >> 20} MiB per TensorCore; use smaller tiles "
            "(TODO(synk): add a D-axis reduction grid for very large in_features).")
    vmem_limit = min(max(vmem_limit, needed), vmem_cap)

    kernel = functools.partial(_arc_subcenter_kernel, k=k)
    grid = (B // tile_b, out_features // tile_out)

    return pl.pallas_call(
        kernel,
        out_shape=jax.ShapeDtypeStruct((B, out_features), features.dtype),
        grid_spec=pltpu.PrefetchScalarGridSpec(
            num_scalar_prefetch=0,
            grid=grid,
            in_specs=[
                # Features: depends only on the batch-tile index -> resident
                # across the (fast) class-tile axis.
                pl.BlockSpec((tile_b, D), lambda i, j: (i, 0)),
                # Weights: one (k, tile_out, D) slab per class tile, pipelined.
                pl.BlockSpec((k, tile_out, D), lambda i, j: (0, j, 0)),
            ],
            out_specs=pl.BlockSpec((tile_b, tile_out), lambda i, j: (i, j)),
        ),
        compiler_params=pltpu.CompilerParams(
            # Batch tiles and class tiles are independent -> megacore-shardable.
            dimension_semantics=("parallel", "parallel"),
            vmem_limit_bytes=vmem_limit,
        ),
    )(features, wn_k)


def _reference(features, weight, *, out_features, k):
    f = features.astype(jnp.float32)
    w = weight.astype(jnp.float32)
    fn = f / jnp.maximum(jnp.linalg.norm(f, axis=-1, keepdims=True), EPS)
    wn = w / jnp.maximum(jnp.linalg.norm(w, axis=-1, keepdims=True), EPS)
    cos_all = fn @ wn.T                                   # (B, out*k)
    return jnp.max(cos_all.reshape(-1, out_features, k), axis=2)


if __name__ == "__main__":
    in_features = 64
    out_features = 512
    k = 3
    batch = 8

    key = jax.random.PRNGKey(0)
    kf, kw = jax.random.split(key)

    features = jax.random.normal(kf, (batch, in_features), dtype=jnp.float32)

    # reset_parameters(): U(-stdv, stdv), stdv = 1/sqrt(in_features)
    stdv = 1.0 / math.sqrt(in_features)
    weight = jax.random.uniform(
        kw, (out_features * k, in_features), minval=-stdv, maxval=stdv,
        dtype=jnp.float32,
    )

    ref = _reference(features, weight, out_features=out_features, k=k)

    # --- production path: bf16 weights in HBM (halves the dominant DMA traffic),
    #     auto-derived tiles (collapses to a single grid step for this tiny head).
    wn_bf16 = prepare_weights(
        weight, out_features=out_features, k=k, weight_dtype=jnp.bfloat16)
    out = arc_margin_product_subcenter(
        features, wn_bf16, out_features=out_features, k=k)
    out = jax.block_until_ready(out)
    assert out.shape == (batch, out_features)
    assert jnp.allclose(out, ref, atol=1.5e-2, rtol=0.0), "bf16 path mismatch vs reference"

    # --- f32 path with explicit small tiles: exercises the multi-step class
    #     tiling + fused max-over-k logic under a tighter tolerance.
    wn_f32 = prepare_weights(
        weight, out_features=out_features, k=k, weight_dtype=jnp.float32)
    out32 = arc_margin_product_subcenter(
        features, wn_f32, out_features=out_features, k=k, tile_out=128)
    out32 = jax.block_until_ready(out32)
    assert jnp.allclose(out32, ref, atol=2e-3, rtol=0.0), "f32 path mismatch vs reference"

    print("KERNEL_OK")
</pallas_src>

<mosaic_0001>
module attributes {stable_mosaic.version = 11 : i64} {
  func.func @_arc_subcenter_kernel(%arg0: i32, %arg1: i32, %arg2: memref<8x64xf32, #tpu.memory_space<vmem>>, %arg3: memref<3x512x64xbf16, #tpu.memory_space<vmem>>, %arg4: memref<8x512xf32, #tpu.memory_space<vmem>>) attributes {dimension_semantics = [#tpu.dimension_semantics<parallel>, #tpu.dimension_semantics<parallel>], iteration_bounds = array<i64: 1, 1>, scalar_prefetch = 0 : i64, scratch_operands = 0 : i64, tpu.core_type = #tpu.core_type<tc>, window_params = [{transform_indices = @transform_0, window_bounds = array<i64: 8, 64>}, {transform_indices = @transform_1, window_bounds = array<i64: 3, 512, 64>}, {transform_indices = @transform_2, window_bounds = array<i64: 8, 512>}]} {
    %c0 = arith.constant 0 : index
    %c0_0 = arith.constant 0 : index
    %0 = vector.load %arg2[%c0, %c0_0] : memref<8x64xf32, #tpu.memory_space<vmem>>, vector<8x64xf32>
    %1 = arith.mulf %0, %0 : vector<8x64xf32>
    %cst = arith.constant dense<0.000000e+00> : vector<8xf32>
    %2 = vector.multi_reduction <add>, %1, %cst [1] : vector<8x64xf32> to vector<8xf32>
    %3 = vector.shape_cast %2 : vector<8xf32> to vector<8x1xf32>
    %cst_1 = arith.constant 1.000000e-24 : f32
    %4 = vector.broadcast %cst_1 : f32 to vector<8x1xf32>
    %5 = arith.maximumf %3, %4 : vector<8x1xf32>
    %6 = math.rsqrt %5 : vector<8x1xf32>
    %7 = vector.broadcast %6 : vector<8x1xf32> to vector<8x64xf32>
    %8 = arith.mulf %0, %7 : vector<8x64xf32>
    %9 = arith.truncf %8 : vector<8x64xf32> to vector<8x64xbf16>
    %c0_2 = arith.constant 0 : index
    %c0_3 = arith.constant 0 : index
    %c0_4 = arith.constant 0 : index
    %10 = vector.load %arg3[%c0_2, %c0_3, %c0_4] : memref<3x512x64xbf16, #tpu.memory_space<vmem>>, vector<3x512x64xbf16>
    %11 = vector.shape_cast %10 : vector<3x512x64xbf16> to vector<1536x64xbf16>
    %cst_5 = arith.constant dense<0.000000e+00> : vector<8x1536xf32>
    %12 = tpu.matmul %9, %11, %cst_5 {dimension_numbers = #tpu.dot_dimension_numbers<[1], [1], [0], [0], [0, 0, 1, 0], [], []>} : vector<8x64xbf16>, vector<1536x64xbf16>, vector<8x1536xf32> -> vector<8x1536xf32>
    %13 = vector.extract_strided_slice %12 {offsets = [0, 0], sizes = [8, 512], strides = [1, 1]} : vector<8x1536xf32> to vector<8x512xf32>
    %14 = vector.extract_strided_slice %12 {offsets = [0, 512], sizes = [8, 512], strides = [1, 1]} : vector<8x1536xf32> to vector<8x512xf32>
    %15 = arith.maximumf %13, %14 : vector<8x512xf32>
    %16 = vector.extract_strided_slice %12 {offsets = [0, 1024], sizes = [8, 512], strides = [1, 1]} : vector<8x1536xf32> to vector<8x512xf32>
    %17 = arith.maximumf %15, %16 : vector<8x512xf32>
    %c0_6 = arith.constant 0 : index
    %c0_7 = arith.constant 0 : index
    %18 = vector.load %arg4[%c0_6, %c0_7] : memref<8x512xf32, #tpu.memory_space<vmem>>, vector<8x512xf32>
    tpu.vector_store %arg4[%c0_6, %c0_7], %17 {strides = array<i32>} : memref<8x512xf32, #tpu.memory_space<vmem>>, vector<8x512xf32>,
    return
  }
  func.func @transform_0(%arg0: i32, %arg1: i32) -> (i32, i32) {
    %c0_i32 = arith.constant 0 : i32
    %c0_i32_0 = arith.constant 0 : i32
    return %arg0, %c0_i32 : i32, i32
  }
  func.func @transform_1(%arg0: i32, %arg1: i32) -> (i32, i32, i32) {
    %c0_i32 = arith.constant 0 : i32
    %c0_i32_0 = arith.constant 0 : i32
    %c0_i32_1 = arith.constant 0 : i32
    return %c0_i32, %arg1, %c0_i32_0 : i32, i32, i32
  }
  func.func @transform_2(%arg0: i32, %arg1: i32) -> (i32, i32) {
    %c0_i32 = arith.constant 0 : i32
    return %arg0, %arg1 : i32, i32
  }
}

</mosaic_0001>

<llo_original>
// kernel: tpu_custom_call.1
$region0: #{tpu_custom_call.1}
  #allocation0 [shape = 'u32[]', space=smem, size = 0x4, offset = 0x4, fixed_abs, tag = 'smem constant byte address 0x4 - core index']
  #allocation1 [shape = 'u32[144,128]{1,0:T(1,128)}', space=vmem, size = 0x12000, scoped, tag = 'internal scratch']
  %s0 = inlined_call_operand.vmem [shape: f32[8,64], index: 0, kind: input, shape index: {}]
  %s1 = inlined_call_operand.vmem [shape: bf16[3,512,64], index: 1, kind: input, shape index: {}]
  %s2 = inlined_call_operand.hbm [shape: f32[8,512], index: 2, kind: output, shape index: {}]
  %s3 = sld [smem:[#allocation0]]
  $region18: #{tpu_custom_call.1} parent=0
    _
  %s5 = ssub.s32 1, %s3
  %s6 = scalar_select 0, %s5, %s3
  $region1: #{tpu_custom_call.1} parent=0
    #allocation2 [shape = 'u8[16384]{0}', space=vmem, size = 0x4000, scoped, tag = 'output window, operand 0, single buffered']
    #allocation3 [shape = 's32[1]{0}', space=sflag, size = 0x4, scoped, tag = 'scoped memory for tpu_custom_call.1']
    %7 = vsyncpa [#allocation3], 0
    // Predicated region
    $region2: #{tpu_custom_call.1} parent=1 // pred_check
      _
    $region3: #{tpu_custom_call.1} parent=1 // pred_check_branch
      %9 = sbr.rel (0) target = $region5
    $region4: #{tpu_custom_call.1} parent=1 // pred_region
      _
    $region5: #{tpu_custom_call.1} parent=1 // pred_fallthru
      _
    // Predicated region
    $region6: #{tpu_custom_call.1} parent=1 // pred_check
      _
    $region7: #{tpu_custom_call.1} parent=1 // pred_check_branch
      %11 = sbr.rel (0) target = $region9
    $region8: #{tpu_custom_call.1} parent=1 // pred_region
      _
    $region9: #{tpu_custom_call.1} parent=1 // pred_fallthru
      _
    %v13 = vld [vmem:[%s0] sm:$0xff]
    %v14 = vmul.f32 %v13, %v13
    %vm15 = vcmask 523264
    %v16 = vsel %vm15, %v14, 0.0
    %17 = vadd.xlane.f32.xlu0 %v16
    %v18 = vpop.xlane.xlu0 %17
    %v19 = vmax.f32 %v18, 1e-24
    %v20 = vrsqrt.pop %v19
    %v21 = vmul.f32 %v13, %v20
    %v22 = vpack.c.bf16 %v21, %v21
    %v23 = vld [vmem:[%s1] sm:$0xf]
    %v24 = vld [vmem:[%s1 + $0x4] sm:$0xf]
    %v25 = vld [vmem:[%s1 + $0x8] sm:$0xf]
    %v26 = vld [vmem:[%s1 + $0xc] sm:$0xf]
    %v27 = vld [vmem:[%s1 + $0x10] sm:$0xf]
    %v28 = vld [vmem:[%s1 + $0x14] sm:$0xf]
    %v29 = vld [vmem:[%s1 + $0x18] sm:$0xf]
    %v30 = vld [vmem:[%s1 + $0x1c] sm:$0xf]
    %v31 = vld [vmem:[%s1 + $0x20] sm:$0xf]
    %v32 = vld [vmem:[%s1 + $0x24] sm:$0xf]
    %v33 = vld [vmem:[%s1 + $0x28] sm:$0xf]
    %v34 = vld [vmem:[%s1 + $0x2c] sm:$0xf]
    %v35 = vld [vmem:[%s1 + $0x30] sm:$0xf]
    %v36 = vld [vmem:[%s1 + $0x34] sm:$0xf]
    %v37 = vld [vmem:[%s1 + $0x38] sm:$0xf]
    %v38 = vld [vmem:[%s1 + $0x3c] sm:$0xf]
    %v39 = vld [vmem:[%s1 + $0x40] sm:$0xf]
    %v40 = vld [vmem:[%s1 + $0x44] sm:$0xf]
    %v41 = vld [vmem:[%s1 + $0x48] sm:$0xf]
    %v42 = vld [vmem:[%s1 + $0x4c] sm:$0xf]
    %v43 = vld [vmem:[%s1 + $0x50] sm:$0xf]
    %v44 = vld [vmem:[%s1 + $0x54] sm:$0xf]
    %v45 = vld [vmem:[%s1 + $0x58] sm:$0xf]
    %v46 = vld [vmem:[%s1 + $0x5c] sm:$0xf]
    %v47 = vld [vmem:[%s1 + $0x60] sm:$0xf]
    %v48 = vld [vmem:[%s1 + $0x64] sm:$0xf]
    %v49 = vld [vmem:[%s1 + $0x68] sm:$0xf]
    %v50 = vld [vmem:[%s1 + $0x6c] sm:$0xf]
    %v51 = vld [vmem:[%s1 + $0x70] sm:$0xf]
    %v52 = vld [vmem:[%s1 + $0x74] sm:$0xf]
    %v53 = vld [vmem:[%s1 + $0x78] sm:$0xf]
    %v54 = vld [vmem:[%s1 + $0x7c] sm:$0xf]
    %v55 = vld [vmem:[%s1 + $0x80] sm:$0xf]
    %v56 = vld [vmem:[%s1 + $0x84] sm:$0xf]
    %v57 = vld [vmem:[%s1 + $0x88] sm:$0xf]
    %v58 = vld [vmem:[%s1 + $0x8c] sm:$0xf]
    %v59 = vld [vmem:[%s1 + $0x90] sm:$0xf]
    %v60 = vld [vmem:[%s1 + $0x94] sm:$0xf]
    %v61 = vld [vmem:[%s1 + $0x98] sm:$0xf]
    %v62 = vld [vmem:[%s1 + $0x9c] sm:$0xf]
    %v63 = vld [vmem:[%s1 + $0xa0] sm:$0xf]
    %v64 = vld [vmem:[%s1 + $0xa4] sm:$0xf]
    %v65 = vld [vmem:[%s1 + $0xa8] sm:$0xf]
    %v66 = vld [vmem:[%s1 + $0xac] sm:$0xf]
    %v67 = vld [vmem:[%s1 + $0xb0] sm:$0xf]
    %v68 = vld [vmem:[%s1 + $0xb4] sm:$0xf]
    %v69 = vld [vmem:[%s1 + $0xb8] sm:$0xf]
    %v70 = vld [vmem:[%s1 + $0xbc] sm:$0xf]
    %v71 = vld [vmem:[%s1 + $0xc0] sm:$0xf]
    %v72 = vld [vmem:[%s1 + $0xc4] sm:$0xf]
    %v73 = vld [vmem:[%s1 + $0xc8] sm:$0xf]
    %v74 = vld [vmem:[%s1 + $0xcc] sm:$0xf]
    %v75 = vld [vmem:[%s1 + $0xd0] sm:$0xf]
    %v76 = vld [vmem:[%s1 + $0xd4] sm:$0xf]
    %v77 = vld [vmem:[%s1 + $0xd8] sm:$0xf]
    %v78 = vld [vmem:[%s1 + $0xdc] sm:$0xf]
    %v79 = vld [vmem:[%s1 + $0xe0] sm:$0xf]
    %v80 = vld [vmem:[%s1 + $0xe4] sm:$0xf]
    %v81 = vld [vmem:[%s1 + $0xe8] sm:$0xf]
    %v82 = vld [vmem:[%s1 + $0xec] sm:$0xf]
    %v83 = vld [vmem:[%s1 + $0xf0] sm:$0xf]
    %v84 = vld [vmem:[%s1 + $0xf4] sm:$0xf]
    %v85 = vld [vmem:[%s1 + $0xf8] sm:$0xf]
    %v86 = vld [vmem:[%s1 + $0xfc] sm:$0xf]
    %v87 = vld [vmem:[%s1 + $0x100] sm:$0xf]
    %v88 = vld [vmem:[%s1 + $0x104] sm:$0xf]
    %v89 = vld [vmem:[%s1 + $0x108] sm:$0xf]
    %v90 = vld [vmem:[%s1 + $0x10c] sm:$0xf]
    %v91 = vld [vmem:[%s1 + $0x110] sm:$0xf]
    %v92 = vld [vmem:[%s1 + $0x114] sm:$0xf]
    %v93 = vld [vmem:[%s1 + $0x118] sm:$0xf]
    %v94 = vld [vmem:[%s1 + $0x11c] sm:$0xf]
    %v95 = vld [vmem:[%s1 + $0x120] sm:$0xf]
    %v96 = vld [vmem:[%s1 + $0x124] sm:$0xf]
    %v97 = vld [vmem:[%s1 + $0x128] sm:$0xf]
    %v98 = vld [vmem:[%s1 + $0x12c] sm:$0xf]
    %v99 = vld [vmem:[%s1 + $0x130] sm:$0xf]
    %v100 = vld [vmem:[%s1 + $0x134] sm:$0xf]
    %v101 = vld [vmem:[%s1 + $0x138] sm:$0xf]
    %v102 = vld [vmem:[%s1 + $0x13c] sm:$0xf]
    %v103 = vld [vmem:[%s1 + $0x140] sm:$0xf]
    %v104 = vld [vmem:[%s1 + $0x144] sm:$0xf]
    %v105 = vld [vmem:[%s1 + $0x148] sm:$0xf]
    %v106 = vld [vmem:[%s1 + $0x14c] sm:$0xf]
    %v107 = vld [vmem:[%s1 + $0x150] sm:$0xf]
    %v108 = vld [vmem:[%s1 + $0x154] sm:$0xf]
    %v109 = vld [vmem:[%s1 + $0x158] sm:$0xf]
    %v110 = vld [vmem:[%s1 + $0x15c] sm:$0xf]
    %v111 = vld [vmem:[%s1 + $0x160] sm:$0xf]
    %v112 = vld [vmem:[%s1 + $0x164] sm:$0xf]
    %v113 = vld [vmem:[%s1 + $0x168] sm:$0xf]
    %v114 = vld [vmem:[%s1 + $0x16c] sm:$0xf]
    %v115 = vld [vmem:[%s1 + $0x170] sm:$0xf]
    %v116 = vld [vmem:[%s1 + $0x174] sm:$0xf]
    %v117 = vld [vmem:[%s1 + $0x178] sm:$0xf]
    %v118 = vld [vmem:[%s1 + $0x17c] sm:$0xf]
    %v119 = vld [vmem:[%s1 + $0x180] sm:$0xf]
    %v120 = vld [vmem:[%s1 + $0x184] sm:$0xf]
    %v121 = vld [vmem:[%s1 + $0x188] sm:$0xf]
    %v122 = vld [vmem:[%s1 + $0x18c] sm:$0xf]
    %v123 = vld [vmem:[%s1 + $0x190] sm:$0xf]
    %v124 = vld [vmem:[%s1 + $0x194] sm:$0xf]
    %v125 = vld [vmem:[%s1 + $0x198] sm:$0xf]
    %v126 = vld [vmem:[%s1 + $0x19c] sm:$0xf]
    %v127 = vld [vmem:[%s1 + $0x1a0] sm:$0xf]
    %v128 = vld [vmem:[%s1 + $0x1a4] sm:$0xf]
    %v129 = vld [vmem:[%s1 + $0x1a8] sm:$0xf]
    %v130 = vld [vmem:[%s1 + $0x1ac] sm:$0xf]
    %v131 = vld [vmem:[%s1 + $0x1b0] sm:$0xf]
    %v132 = vld [vmem:[%s1 + $0x1b4] sm:$0xf]
    %v133 = vld [vmem:[%s1 + $0x1b8] sm:$0xf]
    %v134 = vld [vmem:[%s1 + $0x1bc] sm:$0xf]
    %v135 = vld [vmem:[%s1 + $0x1c0] sm:$0xf]
    %v136 = vld [vmem:[%s1 + $0x1c4] sm:$0xf]
    %v137 = vld [vmem:[%s1 + $0x1c8] sm:$0xf]
    %v138 = vld [vmem:[%s1 + $0x1cc] sm:$0xf]
    %v139 = vld [vmem:[%s1 + $0x1d0] sm:$0xf]
    %v140 = vld [vmem:[%s1 + $0x1d4] sm:$0xf]
    %v141 = vld [vmem:[%s1 + $0x1d8] sm:$0xf]
    %v142 = vld [vmem:[%s1 + $0x1dc] sm:$0xf]
    %v143 = vld [vmem:[%s1 + $0x1e0] sm:$0xf]
    %v144 = vld [vmem:[%s1 + $0x1e4] sm:$0xf]
    %v145 = vld [vmem:[%s1 + $0x1e8] sm:$0xf]
    %v146 = vld [vmem:[%s1 + $0x1ec] sm:$0xf]
    %v147 = vld [vmem:[%s1 + $0x1f0] sm:$0xf]
    %v148 = vld [vmem:[%s1 + $0x1f4] sm:$0xf]
    %v149 = vld [vmem:[%s1 + $0x1f8] sm:$0xf]
    %v150 = vld [vmem:[%s1 + $0x1fc] sm:$0xf]
    %v151 = vld [vmem:[%s1 + $0x200] sm:$0xf]
    %v152 = vld [vmem:[%s1 + $0x204] sm:$0xf]
    %v153 = vld [vmem:[%s1 + $0x208] sm:$0xf]
    %v154 = vld [vmem:[%s1 + $0x20c] sm:$0xf]
    %v155 = vld [vmem:[%s1 + $0x210] sm:$0xf]
    %v156 = vld [vmem:[%s1 + $0x214] sm:$0xf]
    %v157 = vld [vmem:[%s1 + $0x218] sm:$0xf]
    %v158 = vld [vmem:[%s1 + $0x21c] sm:$0xf]
    %v159 = vld [vmem:[%s1 + $0x220] sm:$0xf]
    %v160 = vld [vmem:[%s1 + $0x224] sm:$0xf]
    %v161 = vld [vmem:[%s1 + $0x228] sm:$0xf]
    %v162 = vld [vmem:[%s1 + $0x22c] sm:$0xf]
    %v163 = vld [vmem:[%s1 + $0x230] sm:$0xf]
    %v164 = vld [vmem:[%s1 + $0x234] sm:$0xf]
    %v165 = vld [vmem:[%s1 + $0x238] sm:$0xf]
    %v166 = vld [vmem:[%s1 + $0x23c] sm:$0xf]
    %v167 = vld [vmem:[%s1 + $0x240] sm:$0xf]
    %v168 = vld [vmem:[%s1 + $0x244] sm:$0xf]
    %v169 = vld [vmem:[%s1 + $0x248] sm:$0xf]
    %v170 = vld [vmem:[%s1 + $0x24c] sm:$0xf]
    %v171 = vld [vmem:[%s1 + $0x250] sm:$0xf]
    %v172 = vld [vmem:[%s1 + $0x254] sm:$0xf]
    %v173 = vld [vmem:[%s1 + $0x258] sm:$0xf]
    %v174 = vld [vmem:[%s1 + $0x25c] sm:$0xf]
    %v175 = vld [vmem:[%s1 + $0x260] sm:$0xf]
    %v176 = vld [vmem:[%s1 + $0x264] sm:$0xf]
    %v177 = vld [vmem:[%s1 + $0x268] sm:$0xf]
    %v178 = vld [vmem:[%s1 + $0x26c] sm:$0xf]
    %v179 = vld [vmem:[%s1 + $0x270] sm:$0xf]
    %v180 = vld [vmem:[%s1 + $0x274] sm:$0xf]
    %v181 = vld [vmem:[%s1 + $0x278] sm:$0xf]
    %v182 = vld [vmem:[%s1 + $0x27c] sm:$0xf]
    %v183 = vld [vmem:[%s1 + $0x280] sm:$0xf]
    %v184 = vld [vmem:[%s1 + $0x284] sm:$0xf]
    %v185 = vld [vmem:[%s1 + $0x288] sm:$0xf]
    %v186 = vld [vmem:[%s1 + $0x28c] sm:$0xf]
    %v187 = vld [vmem:[%s1 + $0x290] sm:$0xf]
    %v188 = vld [vmem:[%s1 + $0x294] sm:$0xf]
    %v189 = vld [vmem:[%s1 + $0x298] sm:$0xf]
    %v190 = vld [vmem:[%s1 + $0x29c] sm:$0xf]
    %v191 = vld [vmem:[%s1 + $0x2a0] sm:$0xf]
    %v192 = vld [vmem:[%s1 + $0x2a4] sm:$0xf]
    %v193 = vld [vmem:[%s1 + $0x2a8] sm:$0xf]
    %v194 = vld [vmem:[%s1 + $0x2ac] sm:$0xf]
    %v195 = vld [vmem:[%s1 + $0x2b0] sm:$0xf]
    %v196 = vld [vmem:[%s1 + $0x2b4] sm:$0xf]
    %v197 = vld [vmem:[%s1 + $0x2b8] sm:$0xf]
    %v198 = vld [vmem:[%s1 + $0x2bc] sm:$0xf]
    %v199 = vld [vmem:[%s1 + $0x2c0] sm:$0xf]
    %v200 = vld [vmem:[%s1 + $0x2c4] sm:$0xf]
    %v201 = vld [vmem:[%s1 + $0x2c8] sm:$0xf]
    %v202 = vld [vmem:[%s1 + $0x2cc] sm:$0xf]
    %v203 = vld [vmem:[%s1 + $0x2d0] sm:$0xf]
    %v204 = vld [vmem:[%s1 + $0x2d4] sm:$0xf]
    %v205 = vld [vmem:[%s1 + $0x2d8] sm:$0xf]
    %v206 = vld [vmem:[%s1 + $0x2dc] sm:$0xf]
    %v207 = vld [vmem:[%s1 + $0x2e0] sm:$0xf]
    %v208 = vld [vmem:[%s1 + $0x2e4] sm:$0xf]
    %v209 = vld [vmem:[%s1 + $0x2e8] sm:$0xf]
    %v210 = vld [vmem:[%s1 + $0x2ec] sm:$0xf]
    %v211 = vld [vmem:[%s1 + $0x2f0] sm:$0xf]
    %v212 = vld [vmem:[%s1 + $0x2f4] sm:$0xf]
    %v213 = vld [vmem:[%s1 + $0x2f8] sm:$0xf]
    %v214 = vld [vmem:[%s1 + $0x2fc] sm:$0xf]
    %v407 = vunpack.c.l.b16 %v23
    %v408 = vunpack.c.l.b16 %v24
    %v409 = vunpack.c.l.b16 %v25
    %v410 = vunpack.c.l.b16 %v26
    %v411 = vunpack.c.l.b16 %v27
    %v412 = vunpack.c.l.b16 %v28
    %v413 = vunpack.c.l.b16 %v29
    %v414 = vunpack.c.l.b16 %v30
    %v415 = vunpack.c.l.b16 %v31
    %v416 = vunpack.c.l.b16 %v32
    %v417 = vunpack.c.l.b16 %v33
    %v418 = vunpack.c.l.b16 %v34
    %v419 = vunpack.c.l.b16 %v35
    %v420 = vunpack.c.l.b16 %v36
    %v421 = vunpack.c.l.b16 %v37
    %v422 = vunpack.c.l.b16 %v38
    %v423 = vunpack.c.l.b16 %v39
    %v424 = vunpack.c.l.b16 %v40
    %v425 = vunpack.c.l.b16 %v41
    %v426 = vunpack.c.l.b16 %v42
    %v427 = vunpack.c.l.b16 %v43
    %v428 = vunpack.c.l.b16 %v44
    %v429 = vunpack.c.l.b16 %v45
    %v430 = vunpack.c.l.b16 %v46
    %v431 = vunpack.c.l.b16 %v47
    %v432 = vunpack.c.l.b16 %v48
    %v433 = vunpack.c.l.b16 %v49
    %v434 = vunpack.c.l.b16 %v50
    %v435 = vunpack.c.l.b16 %v51
    %v436 = vunpack.c.l.b16 %v52
    %v437 = vunpack.c.l.b16 %v53
    %v438 = vunpack.c.l.b16 %v54
    %v439 = vunpack.c.l.b16 %v55
    %v440 = vunpack.c.l.b16 %v56
    %v441 = vunpack.c.l.b16 %v57
    %v442 = vunpack.c.l.b16 %v58
    %v443 = vunpack.c.l.b16 %v59
    %v444 = vunpack.c.l.b16 %v60
    %v445 = vunpack.c.l.b16 %v61
    %v446 = vunpack.c.l.b16 %v62
    %v447 = vunpack.c.l.b16 %v63
    %v448 = vunpack.c.l.b16 %v64
    %v449 = vunpack.c.l.b16 %v65
    %v450 = vunpack.c.l.b16 %v66
    %v451 = vunpack.c.l.b16 %v67
    %v452 = vunpack.c.l.b16 %v68
    %v453 = vunpack.c.l.b16 %v69
    %v454 = vunpack.c.l.b16 %v70
    %v455 = vunpack.c.l.b16 %v71
    %v456 = vunpack.c.l.b16 %v72
    %v457 = vunpack.c.l.b16 %v73
    %v458 = vunpack.c.l.b16 %v74
    %v459 = vunpack.c.l.b16 %v75
    %v460 = vunpack.c.l.b16 %v76
    %v461 = vunpack.c.l.b16 %v77
    %v462 = vunpack.c.l.b16 %v78
    %v463 = vunpack.c.l.b16 %v79
    %v464 = vunpack.c.l.b16 %v80
    %v465 = vunpack.c.l.b16 %v81
    %v466 = vunpack.c.l.b16 %v82
    %v467 = vunpack.c.l.b16 %v83
    %v468 = vunpack.c.l.b16 %v84
    %v469 = vunpack.c.l.b16 %v85
    %v470 = vunpack.c.l.b16 %v86
    %v471 = vunpack.c.l.b16 %v87
    %v472 = vunpack.c.l.b16 %v88
    %v473 = vunpack.c.l.b16 %v89
    %v474 = vunpack.c.l.b16 %v90
    %v475 = vunpack.c.l.b16 %v91
    %v476 = vunpack.c.l.b16 %v92
    %v477 = vunpack.c.l.b16 %v93
    %v478 = vunpack.c.l.b16 %v94
    %v479 = vunpack.c.l.b16 %v95
    %v480 = vunpack.c.l.b16 %v96
    %v481 = vunpack.c.l.b16 %v97
    %v482 = vunpack.c.l.b16 %v98
    %v483 = vunpack.c.l.b16 %v99
    %v484 = vunpack.c.l.b16 %v100
    %v485 = vunpack.c.l.b16 %v101
    %v486 = vunpack.c.l.b16 %v102
    %v487 = vunpack.c.l.b16 %v103
    %v488 = vunpack.c.l.b16 %v104
    %v489 = vunpack.c.l.b16 %v105
    %v490 = vunpack.c.l.b16 %v106
    %v491 = vunpack.c.l.b16 %v107
    %v492 = vunpack.c.l.b16 %v108
    %v493 = vunpack.c.l.b16 %v109
    %v494 = vunpack.c.l.b16 %v110
    %v495 = vunpack.c.l.b16 %v111
    %v496 = vunpack.c.l.b16 %v112
    %v497 = vunpack.c.l.b16 %v113
    %v498 = vunpack.c.l.b16 %v114
    %v499 = vunpack.c.l.b16 %v115
    %v500 = vunpack.c.l.b16 %v116
    %v501 = vunpack.c.l.b16 %v117
    %v502 = vunpack.c.l.b16 %v118
    %v503 = vunpack.c.l.b16 %v119
    %v504 = vunpack.c.l.b16 %v120
    %v505 = vunpack.c.l.b16 %v121
    %v506 = vunpack.c.l.b16 %v122
    %v507 = vunpack.c.l.b16 %v123
    %v508 = vunpack.c.l.b16 %v124
    %v509 = vunpack.c.l.b16 %v125
    %v510 = vunpack.c.l.b16 %v126
    %v511 = vunpack.c.l.b16 %v127
    %v512 = vunpack.c.l.b16 %v128
    %v513 = vunpack.c.l.b16 %v129
    %v514 = vunpack.c.l.b16 %v130
    %v515 = vunpack.c.l.b16 %v131
    %v516 = vunpack.c.l.b16 %v132
    %v517 = vunpack.c.l.b16 %v133
    %v518 = vunpack.c.l.b16 %v134
    %v519 = vunpack.c.l.b16 %v135
    %v520 = vunpack.c.l.b16 %v136
    %v521 = vunpack.c.l.b16 %v137
    %v522 = vunpack.c.l.b16 %v138
    %v523 = vunpack.c.l.b16 %v139
    %v524 = vunpack.c.l.b16 %v140
    %v525 = vunpack.c.l.b16 %v141
    %v526 = vunpack.c.l.b16 %v142
    %v527 = vunpack.c.l.b16 %v143
    %v528 = vunpack.c.l.b16 %v144
    %v529 = vunpack.c.l.b16 %v145
    %v530 = vunpack.c.l.b16 %v146
    %v531 = vunpack.c.l.b16 %v147
    %v532 = vunpack.c.l.b16 %v148
    %v533 = vunpack.c.l.b16 %v149
    %v534 = vunpack.c.l.b16 %v150
    %v535 = vunpack.c.l.b16 %v151
    %v536 = vunpack.c.l.b16 %v152
    %v537 = vunpack.c.l.b16 %v153
    %v538 = vunpack.c.l.b16 %v154
    %v539 = vunpack.c.l.b16 %v155
    %v540 = vunpack.c.l.b16 %v156
    %v541 = vunpack.c.l.b16 %v157
    %v542 = vunpack.c.l.b16 %v158
    %v543 = vunpack.c.l.b16 %v159
    %v544 = vunpack.c.l.b16 %v160
    %v545 = vunpack.c.l.b16 %v161
    %v546 = vunpack.c.l.b16 %v162
    %v547 = vunpack.c.l.b16 %v163
    %v548 = vunpack.c.l.b16 %v164
    %v549 = vunpack.c.l.b16 %v165
    %v550 = vunpack.c.l.b16 %v166
    %v551 = vunpack.c.l.b16 %v167
    %v552 = vunpack.c.l.b16 %v168
    %v553 = vunpack.c.l.b16 %v169
    %v554 = vunpack.c.l.b16 %v170
    %v555 = vunpack.c.l.b16 %v171
    %v556 = vunpack.c.l.b16 %v172
    %v557 = vunpack.c.l.b16 %v173
    %v558 = vunpack.c.l.b16 %v174
    %v559 = vunpack.c.l.b16 %v175
    %v560 = vunpack.c.l.b16 %v176
    %v561 = vunpack.c.l.b16 %v177
    %v562 = vunpack.c.l.b16 %v178
    %v563 = vunpack.c.l.b16 %v179
    %v564 = vunpack.c.l.b16 %v180
    %v565 = vunpack.c.l.b16 %v181
    %v566 = vunpack.c.l.b16 %v182
    %v567 = vunpack.c.l.b16 %v183
    %v568 = vunpack.c.l.b16 %v184
    %v569 = vunpack.c.l.b16 %v185
    %v570 = vunpack.c.l.b16 %v186
    %v571 = vunpack.c.l.b16 %v187
    %v572 = vunpack.c.l.b16 %v188
    %v573 = vunpack.c.l.b16 %v189
    %v574 = vunpack.c.l.b16 %v190
    %v575 = vunpack.c.l.b16 %v191
    %v576 = vunpack.c.l.b16 %v192
    %v577 = vunpack.c.l.b16 %v193
    %v578 = vunpack.c.l.b16 %v194
    %v579 = vunpack.c.l.b16 %v195
    %v580 = vunpack.c.l.b16 %v196
    %v581 = vunpack.c.l.b16 %v197
    %v582 = vunpack.c.l.b16 %v198
    %v583 = vunpack.c.l.b16 %v199
    %v584 = vunpack.c.l.b16 %v200
    %v585 = vunpack.c.l.b16 %v201
    %v586 = vunpack.c.l.b16 %v202
    %v587 = vunpack.c.l.b16 %v203
    %v588 = vunpack.c.l.b16 %v204
    %v589 = vunpack.c.l.b16 %v205
    %v590 = vunpack.c.l.b16 %v206
    %v591 = vunpack.c.l.b16 %v207
    %v592 = vunpack.c.l.b16 %v208
    %v593 = vunpack.c.l.b16 %v209
    %v594 = vunpack.c.l.b16 %v210
    %v595 = vunpack.c.l.b16 %v211
    %v596 = vunpack.c.l.b16 %v212
    %v597 = vunpack.c.l.b16 %v213
    %v598 = vunpack.c.l.b16 %v214
    %v599 = vpack.c.b16 %v408, %v407
    %v600 = vpack.c.b16 %v410, %v409
    %v601 = vpack.c.b16 %v412, %v411
    %v602 = vpack.c.b16 %v414, %v413
    %v603 = vpack.c.b16 %v416, %v415
    %v604 = vpack.c.b16 %v418, %v417
    %v605 = vpack.c.b16 %v420, %v419
    %v606 = vpack.c.b16 %v422, %v421
    %v607 = vpack.c.b16 %v424, %v423
    %v608 = vpack.c.b16 %v426, %v425
    %v609 = vpack.c.b16 %v428, %v427
    %v610 = vpack.c.b16 %v430, %v429
    %v611 = vpack.c.b16 %v432, %v431
    %v612 = vpack.c.b16 %v434, %v433
    %v613 = vpack.c.b16 %v436, %v435
    %v614 = vpack.c.b16 %v438, %v437
    %v615 = vpack.c.b16 %v440, %v439
    %v616 = vpack.c.b16 %v442, %v441
    %v617 = vpack.c.b16 %v444, %v443
    %v618 = vpack.c.b16 %v446, %v445
    %v619 = vpack.c.b16 %v448, %v447
    %v620 = vpack.c.b16 %v450, %v449
    %v621 = vpack.c.b16 %v452, %v451
    %v622 = vpack.c.b16 %v454, %v453
    %v623 = vpack.c.b16 %v456, %v455
    %v624 = vpack.c.b16 %v458, %v457
    %v625 = vpack.c.b16 %v460, %v459
    %v626 = vpack.c.b16 %v462, %v461
    %v627 = vpack.c.b16 %v464, %v463
    %v628 = vpack.c.b16 %v466, %v465
    %v629 = vpack.c.b16 %v468, %v467
    %v630 = vpack.c.b16 %v470, %v469
    %v631 = vpack.c.b16 %v472, %v471
    %v632 = vpack.c.b16 %v474, %v473
    %v633 = vpack.c.b16 %v476, %v475
    %v634 = vpack.c.b16 %v478, %v477
    %v635 = vpack.c.b16 %v480, %v479
    %v636 = vpack.c.b16 %v482, %v481
    %v637 = vpack.c.b16 %v484, %v483
    %v638 = vpack.c.b16 %v486, %v485
    %v639 = vpack.c.b16 %v488, %v487
    %v640 = vpack.c.b16 %v490, %v489
    %v641 = vpack.c.b16 %v492, %v491
    %v642 = vpack.c.b16 %v494, %v493
    %v643 = vpack.c.b16 %v496, %v495
    %v644 = vpack.c.b16 %v498, %v497
    %v645 = vpack.c.b16 %v500, %v499
    %v646 = vpack.c.b16 %v502, %v501
    %v647 = vpack.c.b16 %v504, %v503
    %v648 = vpack.c.b16 %v506, %v505
    %v649 = vpack.c.b16 %v508, %v507
    %v650 = vpack.c.b16 %v510, %v509
    %v651 = vpack.c.b16 %v512, %v511
    %v652 = vpack.c.b16 %v514, %v513
    %v653 = vpack.c.b16 %v516, %v515
    %v654 = vpack.c.b16 %v518, %v517
    %v655 = vpack.c.b16 %v520, %v519
    %v656 = vpack.c.b16 %v522, %v521
    %v657 = vpack.c.b16 %v524, %v523
    %v658 = vpack.c.b16 %v526, %v525
    %v659 = vpack.c.b16 %v528, %v527
    %v660 = vpack.c.b16 %v530, %v529
    %v661 = vpack.c.b16 %v532, %v531
    %v662 = vpack.c.b16 %v534, %v533
    %v663 = vpack.c.b16 %v536, %v535
    %v664 = vpack.c.b16 %v538, %v537
    %v665 = vpack.c.b16 %v540, %v539
    %v666 = vpack.c.b16 %v542, %v541
    %v667 = vpack.c.b16 %v544, %v543
    %v668 = vpack.c.b16 %v546, %v545
    %v669 = vpack.c.b16 %v548, %v547
    %v670 = vpack.c.b16 %v550, %v549
    %v671 = vpack.c.b16 %v552, %v551
    %v672 = vpack.c.b16 %v554, %v553
    %v673 = vpack.c.b16 %v556, %v555
    %v674 = vpack.c.b16 %v558, %v557
    %v675 = vpack.c.b16 %v560, %v559
    %v676 = vpack.c.b16 %v562, %v561
    %v677 = vpack.c.b16 %v564, %v563
    %v678 = vpack.c.b16 %v566, %v565
    %v679 = vpack.c.b16 %v568, %v567
    %v680 = vpack.c.b16 %v570, %v569
    %v681 = vpack.c.b16 %v572, %v571
    %v682 = vpack.c.b16 %v574, %v573
    %v683 = vpack.c.b16 %v576, %v575
    %v684 = vpack.c.b16 %v578, %v577
    %v685 = vpack.c.b16 %v580, %v579
    %v686 = vpack.c.b16 %v582, %v581
    %v687 = vpack.c.b16 %v584, %v583
    %v688 = vpack.c.b16 %v586, %v585
    %v689 = vpack.c.b16 %v588, %v587
    %v690 = vpack.c.b16 %v590, %v589
    %v691 = vpack.c.b16 %v592, %v591
    %v692 = vpack.c.b16 %v594, %v593
    %v693 = vpack.c.b16 %v596, %v595
    %v694 = vpack.c.b16 %v598, %v597
    %v696 = vsel %vm15, %v22, 0
    %v699 = vsel %vm15, %v599, 0
    %v702 = vsel %vm15, %v600, 0
    %v705 = vsel %vm15, %v601, 0
    %v708 = vsel %vm15, %v602, 0
    %v711 = vsel %vm15, %v603, 0
    %v714 = vsel %vm15, %v604, 0
    %v717 = vsel %vm15, %v605, 0
    %v720 = vsel %vm15, %v606, 0
    %v723 = vsel %vm15, %v607, 0
    %v726 = vsel %vm15, %v608, 0
    %v729 = vsel %vm15, %v609, 0
    %v732 = vsel %vm15, %v610, 0
    %v735 = vsel %vm15, %v611, 0
    %v738 = vsel %vm15, %v612, 0
    %v741 = vsel %vm15, %v613, 0
    %v744 = vsel %vm15, %v614, 0
    %v747 = vsel %vm15, %v615, 0
    %v750 = vsel %vm15, %v616, 0
    %v753 = vsel %vm15, %v617, 0
    %v756 = vsel %vm15, %v618, 0
    %v759 = vsel %vm15, %v619, 0
    %v762 = vsel %vm15, %v620, 0
    %v765 = vsel %vm15, %v621, 0
    %v768 = vsel %vm15, %v622, 0
    %v771 = vsel %vm15, %v623, 0
    %v774 = vsel %vm15, %v624, 0
    %v777 = vsel %vm15, %v625, 0
    %v780 = vsel %vm15, %v626, 0
    %v783 = vsel %vm15, %v627, 0
    %v786 = vsel %vm15, %v628, 0
    %v789 = vsel %vm15, %v629, 0
    %v792 = vsel %vm15, %v630, 0
    %v795 = vsel %vm15, %v631, 0
    %v798 = vsel %vm15, %v632, 0
    %v801 = vsel %vm15, %v633, 0
    %v804 = vsel %vm15, %v634, 0
    %v807 = vsel %vm15, %v635, 0
    %v810 = vsel %vm15, %v636, 0
    %v813 = vsel %vm15, %v637, 0
    %v816 = vsel %vm15, %v638, 0
    %v819 = vsel %vm15, %v639, 0
    %v822 = vsel %vm15, %v640, 0
    %v825 = vsel %vm15, %v641, 0
    %v828 = vsel %vm15, %v642, 0
    %v831 = vsel %vm15, %v643, 0
    %v834 = vsel %vm15, %v644, 0
    %v837 = vsel %vm15, %v645, 0
    %v840 = vsel %vm15, %v646, 0
    %v843 = vsel %vm15, %v647, 0
    %v846 = vsel %vm15, %v648, 0
    %v849 = vsel %vm15, %v649, 0
    %v852 = vsel %vm15, %v650, 0
    %v855 = vsel %vm15, %v651, 0
    %v858 = vsel %vm15, %v652, 0
    %v861 = vsel %vm15, %v653, 0
    %v864 = vsel %vm15, %v654, 0
    %v867 = vsel %vm15, %v655, 0
    %v870 = vsel %vm15, %v656, 0
    %v873 = vsel %vm15, %v657, 0
    %v876 = vsel %vm15, %v658, 0
    %v879 = vsel %vm15, %v659, 0
    %v882 = vsel %vm15, %v660, 0
    %v885 = vsel %vm15, %v661, 0
    %v888 = vsel %vm15, %v662, 0
    %v891 = vsel %vm15, %v663, 0
    %v894 = vsel %vm15, %v664, 0
    %v897 = vsel %vm15, %v665, 0
    %v900 = vsel %vm15, %v666, 0
    %v903 = vsel %vm15, %v667, 0
    %v906 = vsel %vm15, %v668, 0
    %v909 = vsel %vm15, %v669, 0
    %v912 = vsel %vm15, %v670, 0
    %v915 = vsel %vm15, %v671, 0
    %v918 = vsel %vm15, %v672, 0
    %v921 = vsel %vm15, %v673, 0
    %v924 = vsel %vm15, %v674, 0
    %v927 = vsel %vm15, %v675, 0
    %v930 = vsel %vm15, %v676, 0
    %v933 = vsel %vm15, %v677, 0
    %v936 = vsel %vm15, %v678, 0
    %v939 = vsel %vm15, %v679, 0
    %v942 = vsel %vm15, %v680, 0
    %v945 = vsel %vm15, %v681, 0
    %v948 = vsel %vm15, %v682, 0
    %v951 = vsel %vm15, %v683, 0
    %v954 = vsel %vm15, %v684, 0
    %v957 = vsel %vm15, %v685, 0
    %v960 = vsel %vm15, %v686, 0
    %v963 = vsel %vm15, %v687, 0
    %v966 = vsel %vm15, %v688, 0
    %v969 = vsel %vm15, %v689, 0
    %v972 = vsel %vm15, %v690, 0
    %v975 = vsel %vm15, %v691, 0
    %v978 = vsel %vm15, %v692, 0
    %v981 = vsel %vm15, %v693, 0
    %v984 = vsel %vm15, %v694, 0
    %986 = vmatprep.subr.bf16.mxu0 0
    %987 = vmatpush1.bf16.xpose.msra.mxu0 %v699
    %988 = vmatprep.subr.bf16.mxu0 0
    %989 = vmatpush1.bf16.xpose.msra.mxu0 %v702
    %990 = vmatprep.subr.bf16.mxu0 0
    %991 = vmatpush1.bf16.xpose.msra.mxu0 %v705
    %992 = vmatprep.subr.bf16.mxu0 0
    %993 = vmatpush1.bf16.xpose.msra.mxu0 %v708
    %994 = vmatprep.subr.bf16.mxu0 0
    %995 = vmatpush1.bf16.xpose.msra.mxu0 %v711
    %996 = vmatprep.subr.bf16.mxu0 0
    %997 = vmatpush1.bf16.xpose.msra.mxu0 %v714
    %998 = vmatprep.subr.bf16.mxu0 0
    %999 = vmatpush1.bf16.xpose.msra.mxu0 %v717
    %1000 = vmatprep.subr.bf16.mxu0 0
    %1001 = vmatpush1.bf16.xpose.msra.mxu0 %v720
    %1002 = vmatprep.subr.bf16.mxu0 0
    %1003 = vmatpush1.bf16.xpose.msra.mxu0 %v723
    %1004 = vmatprep.subr.bf16.mxu0 0
    %1005 = vmatpush1.bf16.xpose.msra.mxu0 %v726
    %1006 = vmatprep.subr.bf16.mxu0 0
    %1007 = vmatpush1.bf16.xpose.msra.mxu0 %v729
    %1008 = vmatprep.subr.bf16.mxu0 0
    %1009 = vmatpush1.bf16.xpose.msra.mxu0 %v732
    %1010 = vmatprep.subr.bf16.mxu0 0
    %1011 = vmatpush1.bf16.xpose.msra.mxu0 %v735
    %1012 = vmatprep.subr.bf16.mxu0 0
    %1013 = vmatpush1.bf16.xpose.msra.mxu0 %v738
    %1014 = vmatprep.subr.bf16.mxu0 0
    %1015 = vmatpush1.bf16.xpose.msra.mxu0 %v741
    %1016 = vmatprep.subr.bf16.mxu0 0
    %1017 = vmatpush1.bf16.xpose.msra.mxu0 %v744
    %1018 = vmatprep.mubr.bf16.mxu0 0
    %1019 = vmatmul.mubr.bf16.gmra.mrb[0].mxu0 %v696
    %v1020 = vpop.f32.mrb[0].mxu0
    %v1021 = vadd.f32 0.0, %v1020
    %v1022 = vpop.f32.mrb[0].mxu0
    %v1023 = vadd.f32 0.0, %v1022
    %v1024 = vpop.f32.mrb[0].mxu0
    %v1025 = vpop.f32.mrb[0].mxu0
    %1026 = vdwg.mxu0
    %1027 = vmatprep.subr.bf16.mxu0 0
    %1028 = vmatpush1.bf16.xpose.msra.mxu0 %v747
    %1029 = vmatprep.subr.bf16.mxu0 0
    %1030 = vmatpush1.bf16.xpose.msra.mxu0 %v750
    %1031 = vmatprep.subr.bf16.mxu0 0
    %1032 = vmatpush1.bf16.xpose.msra.mxu0 %v753
    %1033 = vmatprep.subr.bf16.mxu0 0
    %1034 = vmatpush1.bf16.xpose.msra.mxu0 %v756
    %1035 = vmatprep.subr.bf16.mxu0 0
    %1036 = vmatpush1.bf16.xpose.msra.mxu0 %v759
    %1037 = vmatprep.subr.bf16.mxu0 0
    %1038 = vmatpush1.bf16.xpose.msra.mxu0 %v762
    %1039 = vmatprep.subr.bf16.mxu0 0
    %1040 = vmatpush1.bf16.xpose.msra.mxu0 %v765
    %1041 = vmatprep.subr.bf16.mxu0 0
    %1042 = vmatpush1.bf16.xpose.msra.mxu0 %v768
    %1043 = vmatprep.subr.bf16.mxu0 0
    %1044 = vmatpush1.bf16.xpose.msra.mxu0 %v771
    %1045 = vmatprep.subr.bf16.mxu0 0
    %1046 = vmatpush1.bf16.xpose.msra.mxu0 %v774
    %1047 = vmatprep.subr.bf16.mxu0 0
    %1048 = vmatpush1.bf16.xpose.msra.mxu0 %v777
    %1049 = vmatprep.subr.bf16.mxu0 0
    %1050 = vmatpush1.bf16.xpose.msra.mxu0 %v780
    %1051 = vmatprep.subr.bf16.mxu0 0
    %1052 = vmatpush1.bf16.xpose.msra.mxu0 %v783
    %1053 = vmatprep.subr.bf16.mxu0 0
    %1054 = vmatpush1.bf16.xpose.msra.mxu0 %v786
    %1055 = vmatprep.subr.bf16.mxu0 0
    %1056 = vmatpush1.bf16.xpose.msra.mxu0 %v789
    %1057 = vmatprep.subr.bf16.mxu0 0
    %1058 = vmatpush1.bf16.xpose.msra.mxu0 %v792
    %1059 = vmatprep.mubr.bf16.mxu0 0
    %1060 = vmatmul.mubr.bf16.gmra.mrb[0].mxu0 %v696
    %v1061 = vpop.f32.mrb[0].mxu0
    %v1062 = vadd.f32 0.0, %v1061
    %v1063 = vpop.f32.mrb[0].mxu0
    %v1064 = vadd.f32 0.0, %v1063
    %v1065 = vpop.f32.mrb[0].mxu0
    %v1066 = vpop.f32.mrb[0].mxu0
    %1067 = vdwg.mxu0
    %1068 = vmatprep.subr.bf16.mxu0 0
    %1069 = vmatpush1.bf16.xpose.msra.mxu0 %v795
    %1070 = vmatprep.subr.bf16.mxu0 0
    %1071 = vmatpush1.bf16.xpose.msra.mxu0 %v798
    %1072 = vmatprep.subr.bf16.mxu0 0
    %1073 = vmatpush1.bf16.xpose.msra.mxu0 %v801
    %1074 = vmatprep.subr.bf16.mxu0 0
    %1075 = vmatpush1.bf16.xpose.msra.mxu0 %v804
    %1076 = vmatprep.subr.bf16.mxu0 0
    %1077 = vmatpush1.bf16.xpose.msra.mxu0 %v807
    %1078 = vmatprep.subr.bf16.mxu0 0
    %1079 = vmatpush1.bf16.xpose.msra.mxu0 %v810
    %1080 = vmatprep.subr.bf16.mxu0 0
    %1081 = vmatpush1.bf16.xpose.msra.mxu0 %v813
    %1082 = vmatprep.subr.bf16.mxu0 0
    %1083 = vmatpush1.bf16.xpose.msra.mxu0 %v816
    %1084 = vmatprep.subr.bf16.mxu0 0
    %1085 = vmatpush1.bf16.xpose.msra.mxu0 %v819
    %1086 = vmatprep.subr.bf16.mxu0 0
    %1087 = vmatpush1.bf16.xpose.msra.mxu0 %v822
    %1088 = vmatprep.subr.bf16.mxu0 0
    %1089 = vmatpush1.bf16.xpose.msra.mxu0 %v825
    %1090 = vmatprep.subr.bf16.mxu0 0
    %1091 = vmatpush1.bf16.xpose.msra.mxu0 %v828
    %1092 = vmatprep.subr.bf16.mxu0 0
    %1093 = vmatpush1.bf16.xpose.msra.mxu0 %v831
    %1094 = vmatprep.subr.bf16.mxu0 0
    %1095 = vmatpush1.bf16.xpose.msra.mxu0 %v834
    %1096 = vmatprep.subr.bf16.mxu0 0
    %1097 = vmatpush1.bf16.xpose.msra.mxu0 %v837
    %1098 = vmatprep.subr.bf16.mxu0 0
    %1099 = vmatpush1.bf16.xpose.msra.mxu0 %v840
    %1100 = vmatprep.mubr.bf16.mxu0 0
    %1101 = vmatmul.mubr.bf16.gmra.mrb[0].mxu0 %v696
    %v1102 = vpop.f32.mrb[0].mxu0
    %v1103 = vadd.f32 0.0, %v1102
    %v1104 = vpop.f32.mrb[0].mxu0
    %v1105 = vadd.f32 0.0, %v1104
    %v1106 = vpop.f32.mrb[0].mxu0
    %v1107 = vpop.f32.mrb[0].mxu0
    %1108 = vdwg.mxu0
    %1109 = vmatprep.subr.bf16.mxu0 0
    %1110 = vmatpush1.bf16.xpose.msra.mxu0 %v843
    %1111 = vmatprep.subr.bf16.mxu0 0
    %1112 = vmatpush1.bf16.xpose.msra.mxu0 %v846
    %1113 = vmatprep.subr.bf16.mxu0 0
    %1114 = vmatpush1.bf16.xpose.msra.mxu0 %v849
    %1115 = vmatprep.subr.bf16.mxu0 0
    %1116 = vmatpush1.bf16.xpose.msra.mxu0 %v852
    %1117 = vmatprep.subr.bf16.mxu0 0
    %1118 = vmatpush1.bf16.xpose.msra.mxu0 %v855
    %1119 = vmatprep.subr.bf16.mxu0 0
    %1120 = vmatpush1.bf16.xpose.msra.mxu0 %v858
    %1121 = vmatprep.subr.bf16.mxu0 0
    %1122 = vmatpush1.bf16.xpose.msra.mxu0 %v861
    %1123 = vmatprep.subr.bf16.mxu0 0
    %1124 = vmatpush1.bf16.xpose.msra.mxu0 %v864
    %1125 = vmatprep.subr.bf16.mxu0 0
    %1126 = vmatpush1.bf16.xpose.msra.mxu0 %v867
    %1127 = vmatprep.subr.bf16.mxu0 0
    %1128 = vmatpush1.bf16.xpose.msra.mxu0 %v870
    %1129 = vmatprep.subr.bf16.mxu0 0
    %1130 = vmatpush1.bf16.xpose.msra.mxu0 %v873
    %1131 = vmatprep.subr.bf16.mxu0 0
    %1132 = vmatpush1.bf16.xpose.msra.mxu0 %v876
    %1133 = vmatprep.subr.bf16.mxu0 0
    %1134 = vmatpush1.bf16.xpose.msra.mxu0 %v879
    %1135 = vmatprep.subr.bf16.mxu0 0
    %1136 = vmatpush1.bf16.xpose.msra.mxu0 %v882
    %1137 = vmatprep.subr.bf16.mxu0 0
    %1138 = vmatpush1.bf16.xpose.msra.mxu0 %v885
    %1139 = vmatprep.subr.bf16.mxu0 0
    %1140 = vmatpush1.bf16.xpose.msra.mxu0 %v888
    %1141 = vmatprep.mubr.bf16.mxu0 0
    %1142 = vmatmul.mubr.bf16.gmra.mrb[0].mxu0 %v696
    %v1143 = vpop.f32.mrb[0].mxu0
    %v1144 = vadd.f32 0.0, %v1143
    %v1145 = vpop.f32.mrb[0].mxu0
    %v1146 = vadd.f32 0.0, %v1145
    %v1147 = vpop.f32.mrb[0].mxu0
    %v1148 = vpop.f32.mrb[0].mxu0
    %1149 = vdwg.mxu0
    %1150 = vmatprep.subr.bf16.mxu0 0
    %1151 = vmatpush1.bf16.xpose.msra.mxu0 %v891
    %1152 = vmatprep.subr.bf16.mxu0 0
    %1153 = vmatpush1.bf16.xpose.msra.mxu0 %v894
    %1154 = vmatprep.subr.bf16.mxu0 0
    %1155 = vmatpush1.bf16.xpose.msra.mxu0 %v897
    %1156 = vmatprep.subr.bf16.mxu0 0
    %1157 = vmatpush1.bf16.xpose.msra.mxu0 %v900
    %1158 = vmatprep.subr.bf16.mxu0 0
    %1159 = vmatpush1.bf16.xpose.msra.mxu0 %v903
    %1160 = vmatprep.subr.bf16.mxu0 0
    %1161 = vmatpush1.bf16.xpose.msra.mxu0 %v906
    %1162 = vmatprep.subr.bf16.mxu0 0
    %1163 = vmatpush1.bf16.xpose.msra.mxu0 %v909
    %1164 = vmatprep.subr.bf16.mxu0 0
    %1165 = vmatpush1.bf16.xpose.msra.mxu0 %v912
    %1166 = vmatprep.subr.bf16.mxu0 0
    %1167 = vmatpush1.bf16.xpose.msra.mxu0 %v915
    %1168 = vmatprep.subr.bf16.mxu0 0
    %1169 = vmatpush1.bf16.xpose.msra.mxu0 %v918
    %1170 = vmatprep.subr.bf16.mxu0 0
    %1171 = vmatpush1.bf16.xpose.msra.mxu0 %v921
    %1172 = vmatprep.subr.bf16.mxu0 0
    %1173 = vmatpush1.bf16.xpose.msra.mxu0 %v924
    %1174 = vmatprep.subr.bf16.mxu0 0
    %1175 = vmatpush1.bf16.xpose.msra.mxu0 %v927
    %1176 = vmatprep.subr.bf16.mxu0 0
    %1177 = vmatpush1.bf16.xpose.msra.mxu0 %v930
    %1178 = vmatprep.subr.bf16.mxu0 0
    %1179 = vmatpush1.bf16.xpose.msra.mxu0 %v933
    %1180 = vmatprep.subr.bf16.mxu0 0
    %1181 = vmatpush1.bf16.xpose.msra.mxu0 %v936
    %1182 = vmatprep.mubr.bf16.mxu0 0
    %1183 = vmatmul.mubr.bf16.gmra.mrb[0].mxu0 %v696
    %v1184 = vpop.f32.mrb[0].mxu0
    %v1185 = vadd.f32 0.0, %v1184
    %v1186 = vpop.f32.mrb[0].mxu0
    %v1187 = vadd.f32 0.0, %v1186
    %v1188 = vpop.f32.mrb[0].mxu0
    %v1189 = vpop.f32.mrb[0].mxu0
    %1190 = vdwg.mxu0
    %1191 = vmatprep.subr.bf16.mxu0 0
    %1192 = vmatpush1.bf16.xpose.msra.mxu0 %v939
    %1193 = vmatprep.subr.bf16.mxu0 0
    %1194 = vmatpush1.bf16.xpose.msra.mxu0 %v942
    %1195 = vmatprep.subr.bf16.mxu0 0
    %1196 = vmatpush1.bf16.xpose.msra.mxu0 %v945
    %1197 = vmatprep.subr.bf16.mxu0 0
    %1198 = vmatpush1.bf16.xpose.msra.mxu0 %v948
    %1199 = vmatprep.subr.bf16.mxu0 0
    %1200 = vmatpush1.bf16.xpose.msra.mxu0 %v951
    %1201 = vmatprep.subr.bf16.mxu0 0
    %1202 = vmatpush1.bf16.xpose.msra.mxu0 %v954
    %1203 = vmatprep.subr.bf16.mxu0 0
    %1204 = vmatpush1.bf16.xpose.msra.mxu0 %v957
    %1205 = vmatprep.subr.bf16.mxu0 0
    %1206 = vmatpush1.bf16.xpose.msra.mxu0 %v960
    %1207 = vmatprep.subr.bf16.mxu0 0
    %1208 = vmatpush1.bf16.xpose.msra.mxu0 %v963
    %1209 = vmatprep.subr.bf16.mxu0 0
    %1210 = vmatpush1.bf16.xpose.msra.mxu0 %v966
    %1211 = vmatprep.subr.bf16.mxu0 0
    %1212 = vmatpush1.bf16.xpose.msra.mxu0 %v969
    %1213 = vmatprep.subr.bf16.mxu0 0
    %1214 = vmatpush1.bf16.xpose.msra.mxu0 %v972
    %1215 = vmatprep.subr.bf16.mxu0 0
    %1216 = vmatpush1.bf16.xpose.msra.mxu0 %v975
    %1217 = vmatprep.subr.bf16.mxu0 0
    %1218 = vmatpush1.bf16.xpose.msra.mxu0 %v978
    %1219 = vmatprep.subr.bf16.mxu0 0
    %1220 = vmatpush1.bf16.xpose.msra.mxu0 %v981
    %1221 = vmatprep.subr.bf16.mxu0 0
    %1222 = vmatpush1.bf16.xpose.msra.mxu0 %v984
    %1223 = vmatprep.mubr.bf16.mxu0 0
    %1224 = vmatmul.mubr.bf16.gmra.mrb[0].mxu0 %v696
    %v1225 = vpop.f32.mrb[0].mxu0
    %v1226 = vadd.f32 0.0, %v1225
    %v1227 = vpop.f32.mrb[0].mxu0
    %v1228 = vadd.f32 0.0, %v1227
    %v1229 = vpop.f32.mrb[0].mxu0
    %v1230 = vpop.f32.mrb[0].mxu0
    %1231 = vdwg.mxu0
    %v1232 = vmax.f32 %v1021, %v1103
    %v1233 = vmax.f32 %v1023, %v1105
    %v1234 = vmax.f32 %v1062, %v1144
    %v1235 = vmax.f32 %v1064, %v1146
    %v1236 = vmax.f32 %v1232, %v1185
    %v1237 = vmax.f32 %v1233, %v1187
    %v1238 = vmax.f32 %v1234, %v1226
    %v1239 = vmax.f32 %v1235, %v1228
    %1240 = vst [vmem:[#allocation2] sm:$0xff] %v1236
    %1241 = vst [vmem:[#allocation2 + $0x8] sm:$0xff] %v1237
    %1242 = vst [vmem:[#allocation2 + $0x10] sm:$0xff] %v1238
    %1243 = vst [vmem:[#allocation2 + $0x18] sm:$0xff] %v1239
    // Predicated region
    $region10: #{tpu_custom_call.1} parent=1 // pred_check
      _
    $region11: #{tpu_custom_call.1} parent=1 // pred_check_branch
      %1245 = sbr.rel (0) target = $region13
    $region12: #{tpu_custom_call.1} parent=1 // pred_region
      %s1247 = ssub.s32 512, 512
      %1248 = vsyncadd [#allocation3], %s1247
      %s1250 = sshll.u32 [#allocation2], 4
      %s1251 = int_to_ptr.vmem [resolvable:$true] %s1250
      %1253 = dma.vmem_to_hbm [thread:$0]  %s1251, 512, %s2, [#allocation3]
    $region13: #{tpu_custom_call.1} parent=1 // pred_fallthru
      _
    // Predicated region
    $region14: #{tpu_custom_call.1} parent=1 // pred_check
      _
    $region15: #{tpu_custom_call.1} parent=1 // pred_check_branch
      %1255 = sbr.rel (0) target = $region17
    $region16: #{tpu_custom_call.1} parent=1 // pred_region
      %1256 = dma.done [#allocation3], 512
    $region17: #{tpu_custom_call.1} parent=1 // pred_fallthru
      _
    %1257 = vsyncpa [#allocation3], 1

</llo_original>
